<compile_context>
chip_gen: v7x
topology: tpu7x:2x2x1
jax: 0.10.0
libtpu: 0.0.40
codegen_flags: <defaults>
</compile_context>

<pallas_src>
import functools

import jax
import jax.numpy as jnp
from jax.experimental import pallas as pl
from jax.experimental.pallas import tpu as pltpu

NUM_FUNCS = 3          # matches AngularEncoding(num_funcs=3)
LANES = 128


def _freq_bands(num_funcs):
    # Deterministic buffer init, identical to the PyTorch __init__:
    # [1, 2, ..., nf, 1, 1/2, ..., 1/nf]
    return tuple(float(i + 1) for i in range(num_funcs)) + \
           tuple(1.0 / float(i + 1) for i in range(num_funcs))


def _angular_kernel(x_ref, o_ref, *, freqs):
    # x_ref: VMEM (TM, 128)                      lane-dense packed elements
    # o_ref: VMEM (TM, (1 + 2*len(freqs))*128)   component-major slabs
    x = x_ref[...]
    nf2 = len(freqs)
    o_ref[:, 0:LANES] = x
    cache = {}  # dedup identical frequencies (f == 1.0 appears twice)
    for k, f in enumerate(freqs):
        sc = cache.get(f)
        if sc is None:
            xf = x if f == 1.0 else x * f
            sc = (jnp.sin(xf), jnp.cos(xf))
            cache[f] = sc
        s, c = sc
        o_ref[:, LANES * (1 + k): LANES * (2 + k)] = s
        o_ref[:, LANES * (1 + nf2 + k): LANES * (2 + nf2 + k)] = c


def _round_up(a, b):
    return ((a + b - 1) // b) * b


def angular_encoding(x, num_funcs=NUM_FUNCS, max_block_rows=512):
    *lead, d = x.shape
    n = 1
    for s in lead:
        n *= s
    e = n * d                              # number of scalar elements
    nf2 = 2 * num_funcs
    ncomp = 1 + 2 * nf2                    # 13 for num_funcs=3
    out_d = d * ncomp                      # == get_out_dim(d)
    freqs = _freq_bands(num_funcs)

    # Lane-dense repack: flat element stream -> (R, 128), padded to the tile.
    r_needed = -(-e // LANES)
    block_rows = min(max_block_rows, _round_up(max(r_needed, 1), 8))
    r_pad = _round_up(r_needed, block_rows)
    x_flat = x.reshape(-1).astype(jnp.float32)
    if r_pad * LANES != e:
        x_flat = jnp.pad(x_flat, (0, r_pad * LANES - e))
    x2 = x_flat.reshape(r_pad, LANES)

    grid = (r_pad // block_rows,)
    kernel = functools.partial(_angular_kernel, freqs=freqs)
    out2 = pl.pallas_call(
        kernel,
        out_shape=jax.ShapeDtypeStruct((r_pad, ncomp * LANES), jnp.float32),
        grid_spec=pl.GridSpec(
            grid=grid,
            in_specs=[pl.BlockSpec((block_rows, LANES), lambda i: (i, 0))],
            out_specs=pl.BlockSpec((block_rows, ncomp * LANES), lambda i: (i, 0)),
        ),
        compiler_params=pltpu.CompilerParams(
            dimension_semantics=("parallel",)),
    )(x2)

    # Glue: component-major (r, comp, lane) -> element-interleaved (r, lane, comp),
    # drop padding, flatten.  Reproduces PyTorch's per-element layout
    # [x, sin(f0 x)...sin(f5 x), cos(f0 x)...cos(f5 x)].
    out2 = out2[:r_needed]
    code = jnp.swapaxes(out2.reshape(r_needed, ncomp, LANES), 1, 2).reshape(-1)
    code = code[: e * ncomp]
    return code.reshape(*lead, out_d)


def angular_encoding_ref(x, num_funcs=NUM_FUNCS):
    # Pure-JAX reference mirroring the PyTorch forward.
    freq = jnp.asarray(_freq_bands(num_funcs), dtype=jnp.float32)
    xe = x[..., None]
    code = jnp.concatenate([xe, jnp.sin(xe * freq), jnp.cos(xe * freq)], axis=-1)
    return code.reshape(*x.shape[:-1], -1)


if __name__ == "__main__":
    key = jax.random.PRNGKey(0)
    # (..., d) input: batch=2, seq=8, d=4  ->  output (2, 8, 4*13=52)
    x = jax.random.normal(key, (2, 8, 4), dtype=jnp.float32)

    out = jax.block_until_ready(angular_encoding(x))

    ref = angular_encoding_ref(x)
    assert out.shape == (2, 8, 4 * (1 + 4 * NUM_FUNCS)), out.shape
    assert jnp.allclose(out, ref, atol=1e-5, rtol=1e-5), "mismatch vs reference"

    print("KERNEL_OK")
</pallas_src>

<mosaic_0001>
module attributes {stable_mosaic.version = 11 : i64} {
  func.func @_angular_kernel(%arg0: i32, %arg1: memref<8x128xf32, #tpu.memory_space<vmem>>, %arg2: memref<8x1664xf32, #tpu.memory_space<vmem>>) attributes {dimension_semantics = [#tpu.dimension_semantics<parallel>], iteration_bounds = array<i64: 1>, scalar_prefetch = 0 : i64, scratch_operands = 0 : i64, tpu.core_type = #tpu.core_type<tc>, window_params = [{transform_indices = @transform_0, window_bounds = array<i64: 8, 128>}, {transform_indices = @transform_1, window_bounds = array<i64: 8, 1664>}]} {
    %c0 = arith.constant 0 : index
    %c0_0 = arith.constant 0 : index
    %0 = vector.load %arg1[%c0, %c0_0] : memref<8x128xf32, #tpu.memory_space<vmem>>, vector<8x128xf32>
    %c0_1 = arith.constant 0 : index
    %c0_2 = arith.constant 0 : index
    %1 = vector.load %arg2[%c0_1, %c0_2] : memref<8x1664xf32, #tpu.memory_space<vmem>>, vector<8x128xf32>
    tpu.vector_store %arg2[%c0_1, %c0_2], %0 {strides = array<i32>} : memref<8x1664xf32, #tpu.memory_space<vmem>>, vector<8x128xf32>,
    %2 = math.sin %0 : vector<8x128xf32>
    %3 = math.cos %0 : vector<8x128xf32>
    %c0_3 = arith.constant 0 : index
    %c128 = arith.constant 128 : index
    %4 = vector.load %arg2[%c0_3, %c128] : memref<8x1664xf32, #tpu.memory_space<vmem>>, vector<8x128xf32>
    tpu.vector_store %arg2[%c0_3, %c128], %2 {strides = array<i32>} : memref<8x1664xf32, #tpu.memory_space<vmem>>, vector<8x128xf32>,
    %c0_4 = arith.constant 0 : index
    %c896 = arith.constant 896 : index
    %5 = vector.load %arg2[%c0_4, %c896] : memref<8x1664xf32, #tpu.memory_space<vmem>>, vector<8x128xf32>
    tpu.vector_store %arg2[%c0_4, %c896], %3 {strides = array<i32>} : memref<8x1664xf32, #tpu.memory_space<vmem>>, vector<8x128xf32>,
    %cst = arith.constant 2.000000e+00 : f32
    %6 = vector.broadcast %cst : f32 to vector<8x128xf32>
    %7 = arith.mulf %0, %6 : vector<8x128xf32>
    %8 = math.sin %7 : vector<8x128xf32>
    %9 = math.cos %7 : vector<8x128xf32>
    %c0_5 = arith.constant 0 : index
    %c256 = arith.constant 256 : index
    %10 = vector.load %arg2[%c0_5, %c256] : memref<8x1664xf32, #tpu.memory_space<vmem>>, vector<8x128xf32>
    tpu.vector_store %arg2[%c0_5, %c256], %8 {strides = array<i32>} : memref<8x1664xf32, #tpu.memory_space<vmem>>, vector<8x128xf32>,
    %c0_6 = arith.constant 0 : index
    %c1024 = arith.constant 1024 : index
    %11 = vector.load %arg2[%c0_6, %c1024] : memref<8x1664xf32, #tpu.memory_space<vmem>>, vector<8x128xf32>
    tpu.vector_store %arg2[%c0_6, %c1024], %9 {strides = array<i32>} : memref<8x1664xf32, #tpu.memory_space<vmem>>, vector<8x128xf32>,
    %cst_7 = arith.constant 3.000000e+00 : f32
    %12 = vector.broadcast %cst_7 : f32 to vector<8x128xf32>
    %13 = arith.mulf %0, %12 : vector<8x128xf32>
    %14 = math.sin %13 : vector<8x128xf32>
    %15 = math.cos %13 : vector<8x128xf32>
    %c0_8 = arith.constant 0 : index
    %c384 = arith.constant 384 : index
    %16 = vector.load %arg2[%c0_8, %c384] : memref<8x1664xf32, #tpu.memory_space<vmem>>, vector<8x128xf32>
    tpu.vector_store %arg2[%c0_8, %c384], %14 {strides = array<i32>} : memref<8x1664xf32, #tpu.memory_space<vmem>>, vector<8x128xf32>,
    %c0_9 = arith.constant 0 : index
    %c1152 = arith.constant 1152 : index
    %17 = vector.load %arg2[%c0_9, %c1152] : memref<8x1664xf32, #tpu.memory_space<vmem>>, vector<8x128xf32>
    tpu.vector_store %arg2[%c0_9, %c1152], %15 {strides = array<i32>} : memref<8x1664xf32, #tpu.memory_space<vmem>>, vector<8x128xf32>,
    %c0_10 = arith.constant 0 : index
    %c512 = arith.constant 512 : index
    %18 = vector.load %arg2[%c0_10, %c512] : memref<8x1664xf32, #tpu.memory_space<vmem>>, vector<8x128xf32>
    tpu.vector_store %arg2[%c0_10, %c512], %2 {strides = array<i32>} : memref<8x1664xf32, #tpu.memory_space<vmem>>, vector<8x128xf32>,
    %c0_11 = arith.constant 0 : index
    %c1280 = arith.constant 1280 : index
    %19 = vector.load %arg2[%c0_11, %c1280] : memref<8x1664xf32, #tpu.memory_space<vmem>>, vector<8x128xf32>
    tpu.vector_store %arg2[%c0_11, %c1280], %3 {strides = array<i32>} : memref<8x1664xf32, #tpu.memory_space<vmem>>, vector<8x128xf32>,
    %cst_12 = arith.constant 5.000000e-01 : f32
    %20 = vector.broadcast %cst_12 : f32 to vector<8x128xf32>
    %21 = arith.mulf %0, %20 : vector<8x128xf32>
    %22 = math.sin %21 : vector<8x128xf32>
    %23 = math.cos %21 : vector<8x128xf32>
    %c0_13 = arith.constant 0 : index
    %c640 = arith.constant 640 : index
    %24 = vector.load %arg2[%c0_13, %c640] : memref<8x1664xf32, #tpu.memory_space<vmem>>, vector<8x128xf32>
    tpu.vector_store %arg2[%c0_13, %c640], %22 {strides = array<i32>} : memref<8x1664xf32, #tpu.memory_space<vmem>>, vector<8x128xf32>,
    %c0_14 = arith.constant 0 : index
    %c1408 = arith.constant 1408 : index
    %25 = vector.load %arg2[%c0_14, %c1408] : memref<8x1664xf32, #tpu.memory_space<vmem>>, vector<8x128xf32>
    tpu.vector_store %arg2[%c0_14, %c1408], %23 {strides = array<i32>} : memref<8x1664xf32, #tpu.memory_space<vmem>>, vector<8x128xf32>,
    %cst_15 = arith.constant 0.333333343 : f32
    %26 = vector.broadcast %cst_15 : f32 to vector<8x128xf32>
    %27 = arith.mulf %0, %26 : vector<8x128xf32>
    %28 = math.sin %27 : vector<8x128xf32>
    %29 = math.cos %27 : vector<8x128xf32>
    %c0_16 = arith.constant 0 : index
    %c768 = arith.constant 768 : index
    %30 = vector.load %arg2[%c0_16, %c768] : memref<8x1664xf32, #tpu.memory_space<vmem>>, vector<8x128xf32>
    tpu.vector_store %arg2[%c0_16, %c768], %28 {strides = array<i32>} : memref<8x1664xf32, #tpu.memory_space<vmem>>, vector<8x128xf32>,
    %c0_17 = arith.constant 0 : index
    %c1536 = arith.constant 1536 : index
    %31 = vector.load %arg2[%c0_17, %c1536] : memref<8x1664xf32, #tpu.memory_space<vmem>>, vector<8x128xf32>
    tpu.vector_store %arg2[%c0_17, %c1536], %29 {strides = array<i32>} : memref<8x1664xf32, #tpu.memory_space<vmem>>, vector<8x128xf32>,
    return
  }
  func.func @transform_0(%arg0: i32) -> (i32, i32) {
    %c0_i32 = arith.constant 0 : i32
    %c0_i32_0 = arith.constant 0 : i32
    return %arg0, %c0_i32 : i32, i32
  }
  func.func @transform_1(%arg0: i32) -> (i32, i32) {
    %c0_i32 = arith.constant 0 : i32
    %c0_i32_0 = arith.constant 0 : i32
    return %arg0, %c0_i32 : i32, i32
  }
}

</mosaic_0001>

<llo_original>
// kernel: tpu_custom_call.1
$region0: #{tpu_custom_call.1}
  #allocation0 [shape = 'u32[]', space=smem, size = 0x4, offset = 0x4, fixed_abs, tag = 'smem constant byte address 0x4 - core index']
  #allocation1 [shape = 'u32[144,128]{1,0:T(1,128)}', space=vmem, size = 0x12000, scoped, tag = 'internal scratch']
  %s0 = inlined_call_operand.hbm [shape: f32[8,128], index: 0, kind: input, shape index: {}]
  %s1 = inlined_call_operand.hbm [shape: f32[8,1664], index: 1, kind: output, shape index: {}]
  %s2 = sld [smem:[#allocation0]]
  $region18: #{tpu_custom_call.1} parent=0
    _
  %s4 = ssub.s32 1, %s2
  %s5 = scalar_select 0, %s4, %s2
  $region1: #{tpu_custom_call.1} parent=0
    #allocation2 [shape = 'u8[4096]{0}', space=vmem, size = 0x1000, scoped, tag = 'input window, operand 0, single buffered']
    #allocation3 [shape = 's32[1]{0}', space=sflag, size = 0x4, scoped, tag = 'scoped memory for tpu_custom_call.1']
    #allocation4 [shape = 's32[1]{0}', space=sflag, size = 0x4, scoped, tag = 'scoped memory for tpu_custom_call.1']
    #allocation5 [shape = 'u8[53248]{0}', space=vmem, size = 0xd000, scoped, tag = 'output window, operand 0, single buffered']
    %6 = vsyncpa [#allocation3], 0
    %7 = vsyncpa [#allocation4], 0
    // Predicated region
    $region2: #{tpu_custom_call.1} parent=1 // pred_check
      _
    $region3: #{tpu_custom_call.1} parent=1 // pred_check_branch
      %9 = sbr.rel (0) target = $region5
    $region4: #{tpu_custom_call.1} parent=1 // pred_region
      %s11 = ssub.s32 128, 128
      %12 = vsyncadd [#allocation3], %s11
      %s14 = sshll.u32 [#allocation2], 4
      %s15 = int_to_ptr.vmem [resolvable:$true] %s14
      %17 = dma.hbm_to_vmem [thread:$0]  %s0, 128, %s15, [#allocation3]
    $region5: #{tpu_custom_call.1} parent=1 // pred_fallthru
      _
    // Predicated region
    $region6: #{tpu_custom_call.1} parent=1 // pred_check
      _
    $region7: #{tpu_custom_call.1} parent=1 // pred_check_branch
      %19 = sbr.rel (0) target = $region9
    $region8: #{tpu_custom_call.1} parent=1 // pred_region
      %20 = dma.done [#allocation3], 128
    $region9: #{tpu_custom_call.1} parent=1 // pred_fallthru
      _
    %v21 = vld [vmem:[#allocation2] sm:$0xff]
    %22 = vst [vmem:[#allocation5] sm:$0xff] %v21
    %v23 = vand.u32 2147483647, %v21
    %vm24 = vcmp.le.f32.partialorder %v23, 0.7853982
    %vm25 = vcmp.lt.s32.totalorder %v21, 0
    %v26 = vand.u32 %v21, 2139095040
    %v27 = vshrl.u32 %v26, 23
    %v28 = vsub.s32 %v27, 127
    %v29 = vand.u32 2147483647, %v21
    %v30 = vand.u32 %v29, 8388607
    %v31 = vor.u32 %v30, 8388608
    %v32 = vsub.s32 0, %v31
    %v33 = vadd.s32 %v28, 1
    %vm34 = vcmp.gt.s32.totalorder %v33, 0
    %v35 = vsel %vm34, %v33, 0
    %v36 = vshrl.u32 %v35, 5
    %v37 = vand.u32 %v35, 31
    %v38 = vsub.s32 32, %v37
    %v39 = vshrl.u32 683565275, %v38
    %v40 = vshll.u32 683565275, %v37
    %v41 = vshrl.u32 2475754826, %v38
    %v42 = vor.u32 %v40, %v41
    %v43 = vshll.u32 2475754826, %v37
    %v44 = vshrl.u32 2131351028, %v38
    %v45 = vor.u32 %v43, %v44
    %v46 = vshll.u32 2131351028, %v37
    %v47 = vshrl.u32 2102212464, %v38
    %v48 = vor.u32 %v46, %v47
    %v49 = vshll.u32 2102212464, %v37
    %v50 = vshrl.u32 920167782, %v38
    %v51 = vor.u32 %v49, %v50
    %v52 = vshll.u32 920167782, %v37
    %v53 = vshrl.u32 1326507024, %v38
    %v54 = vor.u32 %v52, %v53
    %vm55 = vcmp.lt.s32.totalorder %v36, 1
    %vm56 = vcmp.lt.s32.totalorder %v36, 2
    %vm57 = vcmp.lt.s32.totalorder %v36, 3
    %vm58 = vcmp.lt.s32.totalorder %v36, 4
    %v59 = vsel %vm55, %v39, %v42
    %v60 = vsel %vm58, %v48, 2102212464
    %v61 = vsel %vm57, %v45, %v60
    %v62 = vsel %vm56, %v59, %v61
    %v63 = vsel %vm55, %v42, %v45
    %v64 = vsel %vm58, %v51, 920167782
    %v65 = vsel %vm57, %v48, %v64
    %v66 = vsel %vm56, %v63, %v65
    %v67 = vsel %vm55, %v45, %v48
    %v68 = vsel %vm58, %v54, 1326507024
    %v69 = vsel %vm57, %v51, %v68
    %v70 = vsel %vm56, %v67, %v69
    %v71 = vshll.u32 %v31, 8
    %v72 = vmul.u32.u64.compose %v71, %v70
    %v73 = vextract.low.u32 %v72
    %v74 = vextract.high.u32 %v72
    %v75 = vmul.u32.u64.compose %v71, %v66
    %v76 = vextract.low.u32 %v75
    %v77 = vextract.high.u32 %v75
    %v78 = vmul.u32 %v71, %v62
    %v79 = vadd.s32 %v74, %v76
    %vm80 = vc.u32 %v74, %v76
    %v81 = vadd.s32 %v77, 1
    %v82 = vsel %vm80, %v81, %v77
    %v83 = vadd.s32 %v78, %v82
    %v84 = vadd.s32 %v83, 536870912
    %v85 = vshrl.u32 %v84, 30
    %v86 = vshll.u32 %v85, 30
    %v87 = vsub.s32 %v83, %v86
    %vm88 = vcmp.lt.s32.totalorder %v87, 0
    %v89 = vsub.s32 0, %v87
    %v90 = vsel %vm88, %v89, %v87
    %v91 = vclz %v90
    %v92 = vsub.s32 %v91, 2
    %vm93 = vcmp.gt.s32.totalorder 0, %v92
    %v94 = vsel %vm93, 0, %v92
    %v95 = vsub.s32 32, %v94
    %v96 = vshll.u32 %v87, %v94
    %v97 = vshrl.u32 %v79, %v95
    %v98 = vor.u32 %v96, %v97
    %v99 = vsub.s32 4294967266, %v94
    %v100 = vadd.s32 %v99, 127
    %v101 = vshll.u32 %v100, 23
    %v102 = vor.u32 4788187, %v101
    %v103 = vand.u32 2147483647, %v102
    %v105 = vcvt.s32.f32 %v98
    %v106 = vmul.f32 %v105, %v103
    %v107 = vxor.u32 %v106, 2147483648
    %v108 = vsel %vm25, %v107, %v106
    %v109 = vsub.s32 4, %v85
    %v110 = vsel %vm25, %v109, %v85
    %v111 = vsel %vm24, %v21, %v108
    %v112 = vsel %vm24, 0, %v110
    %v113 = vcosq.f32.pop %v111
    %v114 = vsinq.f32.pop %v111
    %vm115 = vweird.f32 %v21
    %v116 = vadd.s32 %v112, 3
    %v117 = vand.u32 %v116, 3
    %vm118 = vcmp.lt.s32.totalorder %v117, 2
    %vm119 = vcmp.eq.s32.totalorder %v117, 0
    %v120 = vxor.u32 %v114, 2147483648
    %v121 = vsel %vm119, %v113, %v120
    %vm122 = vcmp.eq.s32.totalorder %v117, 2
    %v123 = vxor.u32 %v113, 2147483648
    %v124 = vsel %vm122, %v123, %v114
    %v125 = vsel %vm118, %v121, %v124
    %v126 = vsel %vm115, nan, %v125
    %v127 = vand.u32 2147483647, %v21
    %vm128 = vcmp.le.f32.partialorder %v127, 0.7853982
    %vm129 = vcmp.lt.s32.totalorder %v21, 0
    %v130 = vand.u32 %v21, 2139095040
    %v131 = vshrl.u32 %v130, 23
    %v132 = vsub.s32 %v131, 127
    %v133 = vand.u32 2147483647, %v21
    %v134 = vand.u32 %v133, 8388607
    %v135 = vor.u32 %v134, 8388608
    %v136 = vsub.s32 0, %v135
    %v137 = vadd.s32 %v132, 1
    %vm138 = vcmp.gt.s32.totalorder %v137, 0
    %v139 = vsel %vm138, %v137, 0
    %v140 = vshrl.u32 %v139, 5
    %v141 = vand.u32 %v139, 31
    %v142 = vsub.s32 32, %v141
    %v143 = vshrl.u32 683565275, %v142
    %v144 = vshll.u32 683565275, %v141
    %v145 = vshrl.u32 2475754826, %v142
    %v146 = vor.u32 %v144, %v145
    %v147 = vshll.u32 2475754826, %v141
    %v148 = vshrl.u32 2131351028, %v142
    %v149 = vor.u32 %v147, %v148
    %v150 = vshll.u32 2131351028, %v141
    %v151 = vshrl.u32 2102212464, %v142
    %v152 = vor.u32 %v150, %v151
    %v153 = vshll.u32 2102212464, %v141
    %v154 = vshrl.u32 920167782, %v142
    %v155 = vor.u32 %v153, %v154
    %v156 = vshll.u32 920167782, %v141
    %v157 = vshrl.u32 1326507024, %v142
    %v158 = vor.u32 %v156, %v157
    %vm159 = vcmp.lt.s32.totalorder %v140, 1
    %vm160 = vcmp.lt.s32.totalorder %v140, 2
    %vm161 = vcmp.lt.s32.totalorder %v140, 3
    %vm162 = vcmp.lt.s32.totalorder %v140, 4
    %v163 = vsel %vm159, %v143, %v146
    %v164 = vsel %vm162, %v152, 2102212464
    %v165 = vsel %vm161, %v149, %v164
    %v166 = vsel %vm160, %v163, %v165
    %v167 = vsel %vm159, %v146, %v149
    %v168 = vsel %vm162, %v155, 920167782
    %v169 = vsel %vm161, %v152, %v168
    %v170 = vsel %vm160, %v167, %v169
    %v171 = vsel %vm159, %v149, %v152
    %v172 = vsel %vm162, %v158, 1326507024
    %v173 = vsel %vm161, %v155, %v172
    %v174 = vsel %vm160, %v171, %v173
    %v175 = vshll.u32 %v135, 8
    %v176 = vmul.u32.u64.compose %v175, %v174
    %v177 = vextract.low.u32 %v176
    %v178 = vextract.high.u32 %v176
    %v179 = vmul.u32.u64.compose %v175, %v170
    %v180 = vextract.low.u32 %v179
    %v181 = vextract.high.u32 %v179
    %v182 = vmul.u32 %v175, %v166
    %v183 = vadd.s32 %v178, %v180
    %vm184 = vc.u32 %v178, %v180
    %v185 = vadd.s32 %v181, 1
    %v186 = vsel %vm184, %v185, %v181
    %v187 = vadd.s32 %v182, %v186
    %v188 = vadd.s32 %v187, 536870912
    %v189 = vshrl.u32 %v188, 30
    %v190 = vshll.u32 %v189, 30
    %v191 = vsub.s32 %v187, %v190
    %vm192 = vcmp.lt.s32.totalorder %v191, 0
    %v193 = vsub.s32 0, %v191
    %v194 = vsel %vm192, %v193, %v191
    %v195 = vclz %v194
    %v196 = vsub.s32 %v195, 2
    %vm197 = vcmp.gt.s32.totalorder 0, %v196
    %v198 = vsel %vm197, 0, %v196
    %v199 = vsub.s32 32, %v198
    %v200 = vshll.u32 %v191, %v198
    %v201 = vshrl.u32 %v183, %v199
    %v202 = vor.u32 %v200, %v201
    %v203 = vsub.s32 4294967266, %v198
    %v204 = vadd.s32 %v203, 127
    %v205 = vshll.u32 %v204, 23
    %v206 = vor.u32 4788187, %v205
    %v207 = vand.u32 2147483647, %v206
    %v209 = vcvt.s32.f32 %v202
    %v210 = vmul.f32 %v209, %v207
    %v211 = vxor.u32 %v210, 2147483648
    %v212 = vsel %vm129, %v211, %v210
    %v213 = vsub.s32 4, %v189
    %v214 = vsel %vm129, %v213, %v189
    %v215 = vsel %vm128, %v21, %v212
    %v216 = vsel %vm128, 0, %v214
    %v217 = vcosq.f32.pop %v215
    %v218 = vsinq.f32.pop %v215
    %vm219 = vweird.f32 %v21
    %v220 = vand.u32 %v216, 3
    %vm221 = vcmp.lt.s32.totalorder %v220, 2
    %vm222 = vcmp.eq.s32.totalorder %v220, 0
    %v223 = vxor.u32 %v218, 2147483648
    %v224 = vsel %vm222, %v217, %v223
    %vm225 = vcmp.eq.s32.totalorder %v220, 2
    %v226 = vxor.u32 %v217, 2147483648
    %v227 = vsel %vm225, %v226, %v218
    %v228 = vsel %vm221, %v224, %v227
    %v229 = vsel %vm219, nan, %v228
    %230 = vst [vmem:[#allocation5 + $0x8] sm:$0xff] %v126
    %231 = vst [vmem:[#allocation5 + $0x38] sm:$0xff] %v229
    %v232 = vmul.f32 %v21, 2.0
    %v233 = vand.u32 2147483647, %v232
    %vm234 = vcmp.le.f32.partialorder %v233, 0.7853982
    %vm235 = vcmp.lt.s32.totalorder %v232, 0
    %v236 = vand.u32 %v232, 2139095040
    %v237 = vshrl.u32 %v236, 23
    %v238 = vsub.s32 %v237, 127
    %v239 = vand.u32 2147483647, %v232
    %v240 = vand.u32 %v239, 8388607
    %v241 = vor.u32 %v240, 8388608
    %v242 = vsub.s32 0, %v241
    %v243 = vadd.s32 %v238, 1
    %vm244 = vcmp.gt.s32.totalorder %v243, 0
    %v245 = vsel %vm244, %v243, 0
    %v246 = vshrl.u32 %v245, 5
    %v247 = vand.u32 %v245, 31
    %v248 = vsub.s32 32, %v247
    %v249 = vshrl.u32 683565275, %v248
    %v250 = vshll.u32 683565275, %v247
    %v251 = vshrl.u32 2475754826, %v248
    %v252 = vor.u32 %v250, %v251
    %v253 = vshll.u32 2475754826, %v247
    %v254 = vshrl.u32 2131351028, %v248
    %v255 = vor.u32 %v253, %v254
    %v256 = vshll.u32 2131351028, %v247
    %v257 = vshrl.u32 2102212464, %v248
    %v258 = vor.u32 %v256, %v257
    %v259 = vshll.u32 2102212464, %v247
    %v260 = vshrl.u32 920167782, %v248
    %v261 = vor.u32 %v259, %v260
    %v262 = vshll.u32 920167782, %v247
    %v263 = vshrl.u32 1326507024, %v248
    %v264 = vor.u32 %v262, %v263
    %vm265 = vcmp.lt.s32.totalorder %v246, 1
    %vm266 = vcmp.lt.s32.totalorder %v246, 2
    %vm267 = vcmp.lt.s32.totalorder %v246, 3
    %vm268 = vcmp.lt.s32.totalorder %v246, 4
    %v269 = vsel %vm265, %v249, %v252
    %v270 = vsel %vm268, %v258, 2102212464
    %v271 = vsel %vm267, %v255, %v270
    %v272 = vsel %vm266, %v269, %v271
    %v273 = vsel %vm265, %v252, %v255
    %v274 = vsel %vm268, %v261, 920167782
    %v275 = vsel %vm267, %v258, %v274
    %v276 = vsel %vm266, %v273, %v275
    %v277 = vsel %vm265, %v255, %v258
    %v278 = vsel %vm268, %v264, 1326507024
    %v279 = vsel %vm267, %v261, %v278
    %v280 = vsel %vm266, %v277, %v279
    %v281 = vshll.u32 %v241, 8
    %v282 = vmul.u32.u64.compose %v281, %v280
    %v283 = vextract.low.u32 %v282
    %v284 = vextract.high.u32 %v282
    %v285 = vmul.u32.u64.compose %v281, %v276
    %v286 = vextract.low.u32 %v285
    %v287 = vextract.high.u32 %v285
    %v288 = vmul.u32 %v281, %v272
    %v289 = vadd.s32 %v284, %v286
    %vm290 = vc.u32 %v284, %v286
    %v291 = vadd.s32 %v287, 1
    %v292 = vsel %vm290, %v291, %v287
    %v293 = vadd.s32 %v288, %v292
    %v294 = vadd.s32 %v293, 536870912
    %v295 = vshrl.u32 %v294, 30
    %v296 = vshll.u32 %v295, 30
    %v297 = vsub.s32 %v293, %v296
    %vm298 = vcmp.lt.s32.totalorder %v297, 0
    %v299 = vsub.s32 0, %v297
    %v300 = vsel %vm298, %v299, %v297
    %v301 = vclz %v300
    %v302 = vsub.s32 %v301, 2
    %vm303 = vcmp.gt.s32.totalorder 0, %v302
    %v304 = vsel %vm303, 0, %v302
    %v305 = vsub.s32 32, %v304
    %v306 = vshll.u32 %v297, %v304
    %v307 = vshrl.u32 %v289, %v305
    %v308 = vor.u32 %v306, %v307
    %v309 = vsub.s32 4294967266, %v304
    %v310 = vadd.s32 %v309, 127
    %v311 = vshll.u32 %v310, 23
    %v312 = vor.u32 4788187, %v311
    %v313 = vand.u32 2147483647, %v312
    %v315 = vcvt.s32.f32 %v308
    %v316 = vmul.f32 %v315, %v313
    %v317 = vxor.u32 %v316, 2147483648
    %v318 = vsel %vm235, %v317, %v316
    %v319 = vsub.s32 4, %v295
    %v320 = vsel %vm235, %v319, %v295
    %v321 = vsel %vm234, %v232, %v318
    %v322 = vsel %vm234, 0, %v320
    %v323 = vcosq.f32.pop %v321
    %v324 = vsinq.f32.pop %v321
    %vm325 = vweird.f32 %v232
    %v326 = vadd.s32 %v322, 3
    %v327 = vand.u32 %v326, 3
    %vm328 = vcmp.lt.s32.totalorder %v327, 2
    %vm329 = vcmp.eq.s32.totalorder %v327, 0
    %v330 = vxor.u32 %v324, 2147483648
    %v331 = vsel %vm329, %v323, %v330
    %vm332 = vcmp.eq.s32.totalorder %v327, 2
    %v333 = vxor.u32 %v323, 2147483648
    %v334 = vsel %vm332, %v333, %v324
    %v335 = vsel %vm328, %v331, %v334
    %v336 = vsel %vm325, nan, %v335
    %v337 = vand.u32 2147483647, %v232
    %vm338 = vcmp.le.f32.partialorder %v337, 0.7853982
    %vm339 = vcmp.lt.s32.totalorder %v232, 0
    %v340 = vand.u32 %v232, 2139095040
    %v341 = vshrl.u32 %v340, 23
    %v342 = vsub.s32 %v341, 127
    %v343 = vand.u32 2147483647, %v232
    %v344 = vand.u32 %v343, 8388607
    %v345 = vor.u32 %v344, 8388608
    %v346 = vsub.s32 0, %v345
    %v347 = vadd.s32 %v342, 1
    %vm348 = vcmp.gt.s32.totalorder %v347, 0
    %v349 = vsel %vm348, %v347, 0
    %v350 = vshrl.u32 %v349, 5
    %v351 = vand.u32 %v349, 31
    %v352 = vsub.s32 32, %v351
    %v353 = vshrl.u32 683565275, %v352
    %v354 = vshll.u32 683565275, %v351
    %v355 = vshrl.u32 2475754826, %v352
    %v356 = vor.u32 %v354, %v355
    %v357 = vshll.u32 2475754826, %v351
    %v358 = vshrl.u32 2131351028, %v352
    %v359 = vor.u32 %v357, %v358
    %v360 = vshll.u32 2131351028, %v351
    %v361 = vshrl.u32 2102212464, %v352
    %v362 = vor.u32 %v360, %v361
    %v363 = vshll.u32 2102212464, %v351
    %v364 = vshrl.u32 920167782, %v352
    %v365 = vor.u32 %v363, %v364
    %v366 = vshll.u32 920167782, %v351
    %v367 = vshrl.u32 1326507024, %v352
    %v368 = vor.u32 %v366, %v367
    %vm369 = vcmp.lt.s32.totalorder %v350, 1
    %vm370 = vcmp.lt.s32.totalorder %v350, 2
    %vm371 = vcmp.lt.s32.totalorder %v350, 3
    %vm372 = vcmp.lt.s32.totalorder %v350, 4
    %v373 = vsel %vm369, %v353, %v356
    %v374 = vsel %vm372, %v362, 2102212464
    %v375 = vsel %vm371, %v359, %v374
    %v376 = vsel %vm370, %v373, %v375
    %v377 = vsel %vm369, %v356, %v359
    %v378 = vsel %vm372, %v365, 920167782
    %v379 = vsel %vm371, %v362, %v378
    %v380 = vsel %vm370, %v377, %v379
    %v381 = vsel %vm369, %v359, %v362
    %v382 = vsel %vm372, %v368, 1326507024
    %v383 = vsel %vm371, %v365, %v382
    %v384 = vsel %vm370, %v381, %v383
    %v385 = vshll.u32 %v345, 8
    %v386 = vmul.u32.u64.compose %v385, %v384
    %v387 = vextract.low.u32 %v386
    %v388 = vextract.high.u32 %v386
    %v389 = vmul.u32.u64.compose %v385, %v380
    %v390 = vextract.low.u32 %v389
    %v391 = vextract.high.u32 %v389
    %v392 = vmul.u32 %v385, %v376
    %v393 = vadd.s32 %v388, %v390
    %vm394 = vc.u32 %v388, %v390
    %v395 = vadd.s32 %v391, 1
    %v396 = vsel %vm394, %v395, %v391
    %v397 = vadd.s32 %v392, %v396
    %v398 = vadd.s32 %v397, 536870912
    %v399 = vshrl.u32 %v398, 30
    %v400 = vshll.u32 %v399, 30
    %v401 = vsub.s32 %v397, %v400
    %vm402 = vcmp.lt.s32.totalorder %v401, 0
    %v403 = vsub.s32 0, %v401
    %v404 = vsel %vm402, %v403, %v401
    %v405 = vclz %v404
    %v406 = vsub.s32 %v405, 2
    %vm407 = vcmp.gt.s32.totalorder 0, %v406
    %v408 = vsel %vm407, 0, %v406
    %v409 = vsub.s32 32, %v408
    %v410 = vshll.u32 %v401, %v408
    %v411 = vshrl.u32 %v393, %v409
    %v412 = vor.u32 %v410, %v411
    %v413 = vsub.s32 4294967266, %v408
    %v414 = vadd.s32 %v413, 127
    %v415 = vshll.u32 %v414, 23
    %v416 = vor.u32 4788187, %v415
    %v417 = vand.u32 2147483647, %v416
    %v419 = vcvt.s32.f32 %v412
    %v420 = vmul.f32 %v419, %v417
    %v421 = vxor.u32 %v420, 2147483648
    %v422 = vsel %vm339, %v421, %v420
    %v423 = vsub.s32 4, %v399
    %v424 = vsel %vm339, %v423, %v399
    %v425 = vsel %vm338, %v232, %v422
    %v426 = vsel %vm338, 0, %v424
    %v427 = vcosq.f32.pop %v425
    %v428 = vsinq.f32.pop %v425
    %vm429 = vweird.f32 %v232
    %v430 = vand.u32 %v426, 3
    %vm431 = vcmp.lt.s32.totalorder %v430, 2
    %vm432 = vcmp.eq.s32.totalorder %v430, 0
    %v433 = vxor.u32 %v428, 2147483648
    %v434 = vsel %vm432, %v427, %v433
    %vm435 = vcmp.eq.s32.totalorder %v430, 2
    %v436 = vxor.u32 %v427, 2147483648
    %v437 = vsel %vm435, %v436, %v428
    %v438 = vsel %vm431, %v434, %v437
    %v439 = vsel %vm429, nan, %v438
    %440 = vst [vmem:[#allocation5 + $0x10] sm:$0xff] %v336
    %441 = vst [vmem:[#allocation5 + $0x40] sm:$0xff] %v439
    %v442 = vmul.f32 %v21, 3.0
    %v443 = vand.u32 2147483647, %v442
    %vm444 = vcmp.le.f32.partialorder %v443, 0.7853982
    %vm445 = vcmp.lt.s32.totalorder %v442, 0
    %v446 = vand.u32 %v442, 2139095040
    %v447 = vshrl.u32 %v446, 23
    %v448 = vsub.s32 %v447, 127
    %v449 = vand.u32 2147483647, %v442
    %v450 = vand.u32 %v449, 8388607
    %v451 = vor.u32 %v450, 8388608
    %v452 = vsub.s32 0, %v451
    %v453 = vadd.s32 %v448, 1
    %vm454 = vcmp.gt.s32.totalorder %v453, 0
    %v455 = vsel %vm454, %v453, 0
    %v456 = vshrl.u32 %v455, 5
    %v457 = vand.u32 %v455, 31
    %v458 = vsub.s32 32, %v457
    %v459 = vshrl.u32 683565275, %v458
    %v460 = vshll.u32 683565275, %v457
    %v461 = vshrl.u32 2475754826, %v458
    %v462 = vor.u32 %v460, %v461
    %v463 = vshll.u32 2475754826, %v457
    %v464 = vshrl.u32 2131351028, %v458
    %v465 = vor.u32 %v463, %v464
    %v466 = vshll.u32 2131351028, %v457
    %v467 = vshrl.u32 2102212464, %v458
    %v468 = vor.u32 %v466, %v467
    %v469 = vshll.u32 2102212464, %v457
    %v470 = vshrl.u32 920167782, %v458
    %v471 = vor.u32 %v469, %v470
    %v472 = vshll.u32 920167782, %v457
    %v473 = vshrl.u32 1326507024, %v458
    %v474 = vor.u32 %v472, %v473
    %vm475 = vcmp.lt.s32.totalorder %v456, 1
    %vm476 = vcmp.lt.s32.totalorder %v456, 2
    %vm477 = vcmp.lt.s32.totalorder %v456, 3
    %vm478 = vcmp.lt.s32.totalorder %v456, 4
    %v479 = vsel %vm475, %v459, %v462
    %v480 = vsel %vm478, %v468, 2102212464
    %v481 = vsel %vm477, %v465, %v480
    %v482 = vsel %vm476, %v479, %v481
    %v483 = vsel %vm475, %v462, %v465
    %v484 = vsel %vm478, %v471, 920167782
    %v485 = vsel %vm477, %v468, %v484
    %v486 = vsel %vm476, %v483, %v485
    %v487 = vsel %vm475, %v465, %v468
    %v488 = vsel %vm478, %v474, 1326507024
    %v489 = vsel %vm477, %v471, %v488
    %v490 = vsel %vm476, %v487, %v489
    %v491 = vshll.u32 %v451, 8
    %v492 = vmul.u32.u64.compose %v491, %v490
    %v493 = vextract.low.u32 %v492
    %v494 = vextract.high.u32 %v492
    %v495 = vmul.u32.u64.compose %v491, %v486
    %v496 = vextract.low.u32 %v495
    %v497 = vextract.high.u32 %v495
    %v498 = vmul.u32 %v491, %v482
    %v499 = vadd.s32 %v494, %v496
    %vm500 = vc.u32 %v494, %v496
    %v501 = vadd.s32 %v497, 1
    %v502 = vsel %vm500, %v501, %v497
    %v503 = vadd.s32 %v498, %v502
    %v504 = vadd.s32 %v503, 536870912
    %v505 = vshrl.u32 %v504, 30
    %v506 = vshll.u32 %v505, 30
    %v507 = vsub.s32 %v503, %v506
    %vm508 = vcmp.lt.s32.totalorder %v507, 0
    %v509 = vsub.s32 0, %v507
    %v510 = vsel %vm508, %v509, %v507
    %v511 = vclz %v510
    %v512 = vsub.s32 %v511, 2
    %vm513 = vcmp.gt.s32.totalorder 0, %v512
    %v514 = vsel %vm513, 0, %v512
    %v515 = vsub.s32 32, %v514
    %v516 = vshll.u32 %v507, %v514
    %v517 = vshrl.u32 %v499, %v515
    %v518 = vor.u32 %v516, %v517
    %v519 = vsub.s32 4294967266, %v514
    %v520 = vadd.s32 %v519, 127
    %v521 = vshll.u32 %v520, 23
    %v522 = vor.u32 4788187, %v521
    %v523 = vand.u32 2147483647, %v522
    %v525 = vcvt.s32.f32 %v518
    %v526 = vmul.f32 %v525, %v523
    %v527 = vxor.u32 %v526, 2147483648
    %v528 = vsel %vm445, %v527, %v526
    %v529 = vsub.s32 4, %v505
    %v530 = vsel %vm445, %v529, %v505
    %v531 = vsel %vm444, %v442, %v528
    %v532 = vsel %vm444, 0, %v530
    %v533 = vcosq.f32.pop %v531
    %v534 = vsinq.f32.pop %v531
    %vm535 = vweird.f32 %v442
    %v536 = vadd.s32 %v532, 3
    %v537 = vand.u32 %v536, 3
    %vm538 = vcmp.lt.s32.totalorder %v537, 2
    %vm539 = vcmp.eq.s32.totalorder %v537, 0
    %v540 = vxor.u32 %v534, 2147483648
    %v541 = vsel %vm539, %v533, %v540
    %vm542 = vcmp.eq.s32.totalorder %v537, 2
    %v543 = vxor.u32 %v533, 2147483648
    %v544 = vsel %vm542, %v543, %v534
    %v545 = vsel %vm538, %v541, %v544
    %v546 = vsel %vm535, nan, %v545
    %v547 = vand.u32 2147483647, %v442
    %vm548 = vcmp.le.f32.partialorder %v547, 0.7853982
    %vm549 = vcmp.lt.s32.totalorder %v442, 0
    %v550 = vand.u32 %v442, 2139095040
    %v551 = vshrl.u32 %v550, 23
    %v552 = vsub.s32 %v551, 127
    %v553 = vand.u32 2147483647, %v442
    %v554 = vand.u32 %v553, 8388607
    %v555 = vor.u32 %v554, 8388608
    %v556 = vsub.s32 0, %v555
    %v557 = vadd.s32 %v552, 1
    %vm558 = vcmp.gt.s32.totalorder %v557, 0
    %v559 = vsel %vm558, %v557, 0
    %v560 = vshrl.u32 %v559, 5
    %v561 = vand.u32 %v559, 31
    %v562 = vsub.s32 32, %v561
    %v563 = vshrl.u32 683565275, %v562
    %v564 = vshll.u32 683565275, %v561
    %v565 = vshrl.u32 2475754826, %v562
    %v566 = vor.u32 %v564, %v565
    %v567 = vshll.u32 2475754826, %v561
    %v568 = vshrl.u32 2131351028, %v562
    %v569 = vor.u32 %v567, %v568
    %v570 = vshll.u32 2131351028, %v561
    %v571 = vshrl.u32 2102212464, %v562
    %v572 = vor.u32 %v570, %v571
    %v573 = vshll.u32 2102212464, %v561
    %v574 = vshrl.u32 920167782, %v562
    %v575 = vor.u32 %v573, %v574
    %v576 = vshll.u32 920167782, %v561
    %v577 = vshrl.u32 1326507024, %v562
    %v578 = vor.u32 %v576, %v577
    %vm579 = vcmp.lt.s32.totalorder %v560, 1
    %vm580 = vcmp.lt.s32.totalorder %v560, 2
    %vm581 = vcmp.lt.s32.totalorder %v560, 3
    %vm582 = vcmp.lt.s32.totalorder %v560, 4
    %v583 = vsel %vm579, %v563, %v566
    %v584 = vsel %vm582, %v572, 2102212464
    %v585 = vsel %vm581, %v569, %v584
    %v586 = vsel %vm580, %v583, %v585
    %v587 = vsel %vm579, %v566, %v569
    %v588 = vsel %vm582, %v575, 920167782
    %v589 = vsel %vm581, %v572, %v588
    %v590 = vsel %vm580, %v587, %v589
    %v591 = vsel %vm579, %v569, %v572
    %v592 = vsel %vm582, %v578, 1326507024
    %v593 = vsel %vm581, %v575, %v592
    %v594 = vsel %vm580, %v591, %v593
    %v595 = vshll.u32 %v555, 8
    %v596 = vmul.u32.u64.compose %v595, %v594
    %v597 = vextract.low.u32 %v596
    %v598 = vextract.high.u32 %v596
    %v599 = vmul.u32.u64.compose %v595, %v590
    %v600 = vextract.low.u32 %v599
    %v601 = vextract.high.u32 %v599
    %v602 = vmul.u32 %v595, %v586
    %v603 = vadd.s32 %v598, %v600
    %vm604 = vc.u32 %v598, %v600
    %v605 = vadd.s32 %v601, 1
    %v606 = vsel %vm604, %v605, %v601
    %v607 = vadd.s32 %v602, %v606
    %v608 = vadd.s32 %v607, 536870912
    %v609 = vshrl.u32 %v608, 30
    %v610 = vshll.u32 %v609, 30
    %v611 = vsub.s32 %v607, %v610
    %vm612 = vcmp.lt.s32.totalorder %v611, 0
    %v613 = vsub.s32 0, %v611
    %v614 = vsel %vm612, %v613, %v611
    %v615 = vclz %v614
    %v616 = vsub.s32 %v615, 2
    %vm617 = vcmp.gt.s32.totalorder 0, %v616
    %v618 = vsel %vm617, 0, %v616
    %v619 = vsub.s32 32, %v618
    %v620 = vshll.u32 %v611, %v618
    %v621 = vshrl.u32 %v603, %v619
    %v622 = vor.u32 %v620, %v621
    %v623 = vsub.s32 4294967266, %v618
    %v624 = vadd.s32 %v623, 127
    %v625 = vshll.u32 %v624, 23
    %v626 = vor.u32 4788187, %v625
    %v627 = vand.u32 2147483647, %v626
    %v629 = vcvt.s32.f32 %v622
    %v630 = vmul.f32 %v629, %v627
    %v631 = vxor.u32 %v630, 2147483648
    %v632 = vsel %vm549, %v631, %v630
    %v633 = vsub.s32 4, %v609
    %v634 = vsel %vm549, %v633, %v609
    %v635 = vsel %vm548, %v442, %v632
    %v636 = vsel %vm548, 0, %v634
    %v637 = vcosq.f32.pop %v635
    %v638 = vsinq.f32.pop %v635
    %vm639 = vweird.f32 %v442
    %v640 = vand.u32 %v636, 3
    %vm641 = vcmp.lt.s32.totalorder %v640, 2
    %vm642 = vcmp.eq.s32.totalorder %v640, 0
    %v643 = vxor.u32 %v638, 2147483648
    %v644 = vsel %vm642, %v637, %v643
    %vm645 = vcmp.eq.s32.totalorder %v640, 2
    %v646 = vxor.u32 %v637, 2147483648
    %v647 = vsel %vm645, %v646, %v638
    %v648 = vsel %vm641, %v644, %v647
    %v649 = vsel %vm639, nan, %v648
    %650 = vst [vmem:[#allocation5 + $0x18] sm:$0xff] %v546
    %651 = vst [vmem:[#allocation5 + $0x48] sm:$0xff] %v649
    %652 = vst [vmem:[#allocation5 + $0x20] sm:$0xff] %v126
    %653 = vst [vmem:[#allocation5 + $0x50] sm:$0xff] %v229
    %v654 = vmul.f32 %v21, 0.5
    %v655 = vand.u32 2147483647, %v654
    %vm656 = vcmp.le.f32.partialorder %v655, 0.7853982
    %vm657 = vcmp.lt.s32.totalorder %v654, 0
    %v658 = vand.u32 %v654, 2139095040
    %v659 = vshrl.u32 %v658, 23
    %v660 = vsub.s32 %v659, 127
    %v661 = vand.u32 2147483647, %v654
    %v662 = vand.u32 %v661, 8388607
    %v663 = vor.u32 %v662, 8388608
    %v664 = vsub.s32 0, %v663
    %v665 = vadd.s32 %v660, 1
    %vm666 = vcmp.gt.s32.totalorder %v665, 0
    %v667 = vsel %vm666, %v665, 0
    %v668 = vshrl.u32 %v667, 5
    %v669 = vand.u32 %v667, 31
    %v670 = vsub.s32 32, %v669
    %v671 = vshrl.u32 683565275, %v670
    %v672 = vshll.u32 683565275, %v669
    %v673 = vshrl.u32 2475754826, %v670
    %v674 = vor.u32 %v672, %v673
    %v675 = vshll.u32 2475754826, %v669
    %v676 = vshrl.u32 2131351028, %v670
    %v677 = vor.u32 %v675, %v676
    %v678 = vshll.u32 2131351028, %v669
    %v679 = vshrl.u32 2102212464, %v670
    %v680 = vor.u32 %v678, %v679
    %v681 = vshll.u32 2102212464, %v669
    %v682 = vshrl.u32 920167782, %v670
    %v683 = vor.u32 %v681, %v682
    %v684 = vshll.u32 920167782, %v669
    %v685 = vshrl.u32 1326507024, %v670
    %v686 = vor.u32 %v684, %v685
    %vm687 = vcmp.lt.s32.totalorder %v668, 1
    %vm688 = vcmp.lt.s32.totalorder %v668, 2
    %vm689 = vcmp.lt.s32.totalorder %v668, 3
    %vm690 = vcmp.lt.s32.totalorder %v668, 4
    %v691 = vsel %vm687, %v671, %v674
    %v692 = vsel %vm690, %v680, 2102212464
    %v693 = vsel %vm689, %v677, %v692
    %v694 = vsel %vm688, %v691, %v693
    %v695 = vsel %vm687, %v674, %v677
    %v696 = vsel %vm690, %v683, 920167782
    %v697 = vsel %vm689, %v680, %v696
    %v698 = vsel %vm688, %v695, %v697
    %v699 = vsel %vm687, %v677, %v680
    %v700 = vsel %vm690, %v686, 1326507024
    %v701 = vsel %vm689, %v683, %v700
    %v702 = vsel %vm688, %v699, %v701
    %v703 = vshll.u32 %v663, 8
    %v704 = vmul.u32.u64.compose %v703, %v702
    %v705 = vextract.low.u32 %v704
    %v706 = vextract.high.u32 %v704
    %v707 = vmul.u32.u64.compose %v703, %v698
    %v708 = vextract.low.u32 %v707
    %v709 = vextract.high.u32 %v707
    %v710 = vmul.u32 %v703, %v694
    %v711 = vadd.s32 %v706, %v708
    %vm712 = vc.u32 %v706, %v708
    %v713 = vadd.s32 %v709, 1
    %v714 = vsel %vm712, %v713, %v709
    %v715 = vadd.s32 %v710, %v714
    %v716 = vadd.s32 %v715, 536870912
    %v717 = vshrl.u32 %v716, 30
    %v718 = vshll.u32 %v717, 30
    %v719 = vsub.s32 %v715, %v718
    %vm720 = vcmp.lt.s32.totalorder %v719, 0
    %v721 = vsub.s32 0, %v719
    %v722 = vsel %vm720, %v721, %v719
    %v723 = vclz %v722
    %v724 = vsub.s32 %v723, 2
    %vm725 = vcmp.gt.s32.totalorder 0, %v724
    %v726 = vsel %vm725, 0, %v724
    %v727 = vsub.s32 32, %v726
    %v728 = vshll.u32 %v719, %v726
    %v729 = vshrl.u32 %v711, %v727
    %v730 = vor.u32 %v728, %v729
    %v731 = vsub.s32 4294967266, %v726
    %v732 = vadd.s32 %v731, 127
    %v733 = vshll.u32 %v732, 23
    %v734 = vor.u32 4788187, %v733
    %v735 = vand.u32 2147483647, %v734
    %v737 = vcvt.s32.f32 %v730
    %v738 = vmul.f32 %v737, %v735
    %v739 = vxor.u32 %v738, 2147483648
    %v740 = vsel %vm657, %v739, %v738
    %v741 = vsub.s32 4, %v717
    %v742 = vsel %vm657, %v741, %v717
    %v743 = vsel %vm656, %v654, %v740
    %v744 = vsel %vm656, 0, %v742
    %v745 = vcosq.f32.pop %v743
    %v746 = vsinq.f32.pop %v743
    %vm747 = vweird.f32 %v654
    %v748 = vadd.s32 %v744, 3
    %v749 = vand.u32 %v748, 3
    %vm750 = vcmp.lt.s32.totalorder %v749, 2
    %vm751 = vcmp.eq.s32.totalorder %v749, 0
    %v752 = vxor.u32 %v746, 2147483648
    %v753 = vsel %vm751, %v745, %v752
    %vm754 = vcmp.eq.s32.totalorder %v749, 2
    %v755 = vxor.u32 %v745, 2147483648
    %v756 = vsel %vm754, %v755, %v746
    %v757 = vsel %vm750, %v753, %v756
    %v758 = vsel %vm747, nan, %v757
    %v759 = vand.u32 2147483647, %v654
    %vm760 = vcmp.le.f32.partialorder %v759, 0.7853982
    %vm761 = vcmp.lt.s32.totalorder %v654, 0
    %v762 = vand.u32 %v654, 2139095040
    %v763 = vshrl.u32 %v762, 23
    %v764 = vsub.s32 %v763, 127
    %v765 = vand.u32 2147483647, %v654
    %v766 = vand.u32 %v765, 8388607
    %v767 = vor.u32 %v766, 8388608
    %v768 = vsub.s32 0, %v767
    %v769 = vadd.s32 %v764, 1
    %vm770 = vcmp.gt.s32.totalorder %v769, 0
    %v771 = vsel %vm770, %v769, 0
    %v772 = vshrl.u32 %v771, 5
    %v773 = vand.u32 %v771, 31
    %v774 = vsub.s32 32, %v773
    %v775 = vshrl.u32 683565275, %v774
    %v776 = vshll.u32 683565275, %v773
    %v777 = vshrl.u32 2475754826, %v774
    %v778 = vor.u32 %v776, %v777
    %v779 = vshll.u32 2475754826, %v773
    %v780 = vshrl.u32 2131351028, %v774
    %v781 = vor.u32 %v779, %v780
    %v782 = vshll.u32 2131351028, %v773
    %v783 = vshrl.u32 2102212464, %v774
    %v784 = vor.u32 %v782, %v783
    %v785 = vshll.u32 2102212464, %v773
    %v786 = vshrl.u32 920167782, %v774
    %v787 = vor.u32 %v785, %v786
    %v788 = vshll.u32 920167782, %v773
    %v789 = vshrl.u32 1326507024, %v774
    %v790 = vor.u32 %v788, %v789
    %vm791 = vcmp.lt.s32.totalorder %v772, 1
    %vm792 = vcmp.lt.s32.totalorder %v772, 2
    %vm793 = vcmp.lt.s32.totalorder %v772, 3
    %vm794 = vcmp.lt.s32.totalorder %v772, 4
    %v795 = vsel %vm791, %v775, %v778
    %v796 = vsel %vm794, %v784, 2102212464
    %v797 = vsel %vm793, %v781, %v796
    %v798 = vsel %vm792, %v795, %v797
    %v799 = vsel %vm791, %v778, %v781
    %v800 = vsel %vm794, %v787, 920167782
    %v801 = vsel %vm793, %v784, %v800
    %v802 = vsel %vm792, %v799, %v801
    %v803 = vsel %vm791, %v781, %v784
    %v804 = vsel %vm794, %v790, 1326507024
    %v805 = vsel %vm793, %v787, %v804
    %v806 = vsel %vm792, %v803, %v805
    %v807 = vshll.u32 %v767, 8
    %v808 = vmul.u32.u64.compose %v807, %v806
    %v809 = vextract.low.u32 %v808
    %v810 = vextract.high.u32 %v808
    %v811 = vmul.u32.u64.compose %v807, %v802
    %v812 = vextract.low.u32 %v811
    %v813 = vextract.high.u32 %v811
    %v814 = vmul.u32 %v807, %v798
    %v815 = vadd.s32 %v810, %v812
    %vm816 = vc.u32 %v810, %v812
    %v817 = vadd.s32 %v813, 1
    %v818 = vsel %vm816, %v817, %v813
    %v819 = vadd.s32 %v814, %v818
    %v820 = vadd.s32 %v819, 536870912
    %v821 = vshrl.u32 %v820, 30
    %v822 = vshll.u32 %v821, 30
    %v823 = vsub.s32 %v819, %v822
    %vm824 = vcmp.lt.s32.totalorder %v823, 0
    %v825 = vsub.s32 0, %v823
    %v826 = vsel %vm824, %v825, %v823
    %v827 = vclz %v826
    %v828 = vsub.s32 %v827, 2
    %vm829 = vcmp.gt.s32.totalorder 0, %v828
    %v830 = vsel %vm829, 0, %v828
    %v831 = vsub.s32 32, %v830
    %v832 = vshll.u32 %v823, %v830
    %v833 = vshrl.u32 %v815, %v831
    %v834 = vor.u32 %v832, %v833
    %v835 = vsub.s32 4294967266, %v830
    %v836 = vadd.s32 %v835, 127
    %v837 = vshll.u32 %v836, 23
    %v838 = vor.u32 4788187, %v837
    %v839 = vand.u32 2147483647, %v838
    %v841 = vcvt.s32.f32 %v834
    %v842 = vmul.f32 %v841, %v839
    %v843 = vxor.u32 %v842, 2147483648
    %v844 = vsel %vm761, %v843, %v842
    %v845 = vsub.s32 4, %v821
    %v846 = vsel %vm761, %v845, %v821
    %v847 = vsel %vm760, %v654, %v844
    %v848 = vsel %vm760, 0, %v846
    %v849 = vcosq.f32.pop %v847
    %v850 = vsinq.f32.pop %v847
    %vm851 = vweird.f32 %v654
    %v852 = vand.u32 %v848, 3
    %vm853 = vcmp.lt.s32.totalorder %v852, 2
    %vm854 = vcmp.eq.s32.totalorder %v852, 0
    %v855 = vxor.u32 %v850, 2147483648
    %v856 = vsel %vm854, %v849, %v855
    %vm857 = vcmp.eq.s32.totalorder %v852, 2
    %v858 = vxor.u32 %v849, 2147483648
    %v859 = vsel %vm857, %v858, %v850
    %v860 = vsel %vm853, %v856, %v859
    %v861 = vsel %vm851, nan, %v860
    %862 = vst [vmem:[#allocation5 + $0x28] sm:$0xff] %v758
    %863 = vst [vmem:[#allocation5 + $0x58] sm:$0xff] %v861
    %v864 = vmul.f32 %v21, 0.33333334
    %v865 = vand.u32 2147483647, %v864
    %vm866 = vcmp.le.f32.partialorder %v865, 0.7853982
    %vm867 = vcmp.lt.s32.totalorder %v864, 0
    %v868 = vand.u32 %v864, 2139095040
    %v869 = vshrl.u32 %v868, 23
    %v870 = vsub.s32 %v869, 127
    %v871 = vand.u32 2147483647, %v864
    %v872 = vand.u32 %v871, 8388607
    %v873 = vor.u32 %v872, 8388608
    %v874 = vsub.s32 0, %v873
    %v875 = vadd.s32 %v870, 1
    %vm876 = vcmp.gt.s32.totalorder %v875, 0
    %v877 = vsel %vm876, %v875, 0
    %v878 = vshrl.u32 %v877, 5
    %v879 = vand.u32 %v877, 31
    %v880 = vsub.s32 32, %v879
    %v881 = vshrl.u32 683565275, %v880
    %v882 = vshll.u32 683565275, %v879
    %v883 = vshrl.u32 2475754826, %v880
    %v884 = vor.u32 %v882, %v883
    %v885 = vshll.u32 2475754826, %v879
    %v886 = vshrl.u32 2131351028, %v880
    %v887 = vor.u32 %v885, %v886
    %v888 = vshll.u32 2131351028, %v879
    %v889 = vshrl.u32 2102212464, %v880
    %v890 = vor.u32 %v888, %v889
    %v891 = vshll.u32 2102212464, %v879
    %v892 = vshrl.u32 920167782, %v880
    %v893 = vor.u32 %v891, %v892
    %v894 = vshll.u32 920167782, %v879
    %v895 = vshrl.u32 1326507024, %v880
    %v896 = vor.u32 %v894, %v895
    %vm897 = vcmp.lt.s32.totalorder %v878, 1
    %vm898 = vcmp.lt.s32.totalorder %v878, 2
    %vm899 = vcmp.lt.s32.totalorder %v878, 3
    %vm900 = vcmp.lt.s32.totalorder %v878, 4
    %v901 = vsel %vm897, %v881, %v884
    %v902 = vsel %vm900, %v890, 2102212464
    %v903 = vsel %vm899, %v887, %v902
    %v904 = vsel %vm898, %v901, %v903
    %v905 = vsel %vm897, %v884, %v887
    %v906 = vsel %vm900, %v893, 920167782
    %v907 = vsel %vm899, %v890, %v906
    %v908 = vsel %vm898, %v905, %v907
    %v909 = vsel %vm897, %v887, %v890
    %v910 = vsel %vm900, %v896, 1326507024
    %v911 = vsel %vm899, %v893, %v910
    %v912 = vsel %vm898, %v909, %v911
    %v913 = vshll.u32 %v873, 8
    %v914 = vmul.u32.u64.compose %v913, %v912
    %v915 = vextract.low.u32 %v914
    %v916 = vextract.high.u32 %v914
    %v917 = vmul.u32.u64.compose %v913, %v908
    %v918 = vextract.low.u32 %v917
    %v919 = vextract.high.u32 %v917
    %v920 = vmul.u32 %v913, %v904
    %v921 = vadd.s32 %v916, %v918
    %vm922 = vc.u32 %v916, %v918
    %v923 = vadd.s32 %v919, 1
    %v924 = vsel %vm922, %v923, %v919
    %v925 = vadd.s32 %v920, %v924
    %v926 = vadd.s32 %v925, 536870912
    %v927 = vshrl.u32 %v926, 30
    %v928 = vshll.u32 %v927, 30
    %v929 = vsub.s32 %v925, %v928
    %vm930 = vcmp.lt.s32.totalorder %v929, 0
    %v931 = vsub.s32 0, %v929
    %v932 = vsel %vm930, %v931, %v929
    %v933 = vclz %v932
    %v934 = vsub.s32 %v933, 2
    %vm935 = vcmp.gt.s32.totalorder 0, %v934
    %v936 = vsel %vm935, 0, %v934
    %v937 = vsub.s32 32, %v936
    %v938 = vshll.u32 %v929, %v936
    %v939 = vshrl.u32 %v921, %v937
    %v940 = vor.u32 %v938, %v939
    %v941 = vsub.s32 4294967266, %v936
    %v942 = vadd.s32 %v941, 127
    %v943 = vshll.u32 %v942, 23
    %v944 = vor.u32 4788187, %v943
    %v945 = vand.u32 2147483647, %v944
    %v947 = vcvt.s32.f32 %v940
    %v948 = vmul.f32 %v947, %v945
    %v949 = vxor.u32 %v948, 2147483648
    %v950 = vsel %vm867, %v949, %v948
    %v951 = vsub.s32 4, %v927
    %v952 = vsel %vm867, %v951, %v927
    %v953 = vsel %vm866, %v864, %v950
    %v954 = vsel %vm866, 0, %v952
    %v955 = vcosq.f32.pop %v953
    %v956 = vsinq.f32.pop %v953
    %vm957 = vweird.f32 %v864
    %v958 = vadd.s32 %v954, 3
    %v959 = vand.u32 %v958, 3
    %vm960 = vcmp.lt.s32.totalorder %v959, 2
    %vm961 = vcmp.eq.s32.totalorder %v959, 0
    %v962 = vxor.u32 %v956, 2147483648
    %v963 = vsel %vm961, %v955, %v962
    %vm964 = vcmp.eq.s32.totalorder %v959, 2
    %v965 = vxor.u32 %v955, 2147483648
    %v966 = vsel %vm964, %v965, %v956
    %v967 = vsel %vm960, %v963, %v966
    %v968 = vsel %vm957, nan, %v967
    %v969 = vand.u32 2147483647, %v864
    %vm970 = vcmp.le.f32.partialorder %v969, 0.7853982
    %vm971 = vcmp.lt.s32.totalorder %v864, 0
    %v972 = vand.u32 %v864, 2139095040
    %v973 = vshrl.u32 %v972, 23
    %v974 = vsub.s32 %v973, 127
    %v975 = vand.u32 2147483647, %v864
    %v976 = vand.u32 %v975, 8388607
    %v977 = vor.u32 %v976, 8388608
    %v978 = vsub.s32 0, %v977
    %v979 = vadd.s32 %v974, 1
    %vm980 = vcmp.gt.s32.totalorder %v979, 0
    %v981 = vsel %vm980, %v979, 0
    %v982 = vshrl.u32 %v981, 5
    %v983 = vand.u32 %v981, 31
    %v984 = vsub.s32 32, %v983
    %v985 = vshrl.u32 683565275, %v984
    %v986 = vshll.u32 683565275, %v983
    %v987 = vshrl.u32 2475754826, %v984
    %v988 = vor.u32 %v986, %v987
    %v989 = vshll.u32 2475754826, %v983
    %v990 = vshrl.u32 2131351028, %v984
    %v991 = vor.u32 %v989, %v990
    %v992 = vshll.u32 2131351028, %v983
    %v993 = vshrl.u32 2102212464, %v984
    %v994 = vor.u32 %v992, %v993
    %v995 = vshll.u32 2102212464, %v983
    %v996 = vshrl.u32 920167782, %v984
    %v997 = vor.u32 %v995, %v996
    %v998 = vshll.u32 920167782, %v983
    %v999 = vshrl.u32 1326507024, %v984
    %v1000 = vor.u32 %v998, %v999
    %vm1001 = vcmp.lt.s32.totalorder %v982, 1
    %vm1002 = vcmp.lt.s32.totalorder %v982, 2
    %vm1003 = vcmp.lt.s32.totalorder %v982, 3
    %vm1004 = vcmp.lt.s32.totalorder %v982, 4
    %v1005 = vsel %vm1001, %v985, %v988
    %v1006 = vsel %vm1004, %v994, 2102212464
    %v1007 = vsel %vm1003, %v991, %v1006
    %v1008 = vsel %vm1002, %v1005, %v1007
    %v1009 = vsel %vm1001, %v988, %v991
    %v1010 = vsel %vm1004, %v997, 920167782
    %v1011 = vsel %vm1003, %v994, %v1010
    %v1012 = vsel %vm1002, %v1009, %v1011
    %v1013 = vsel %vm1001, %v991, %v994
    %v1014 = vsel %vm1004, %v1000, 1326507024
    %v1015 = vsel %vm1003, %v997, %v1014
    %v1016 = vsel %vm1002, %v1013, %v1015
    %v1017 = vshll.u32 %v977, 8
    %v1018 = vmul.u32.u64.compose %v1017, %v1016
    %v1019 = vextract.low.u32 %v1018
    %v1020 = vextract.high.u32 %v1018
    %v1021 = vmul.u32.u64.compose %v1017, %v1012
    %v1022 = vextract.low.u32 %v1021
    %v1023 = vextract.high.u32 %v1021
    %v1024 = vmul.u32 %v1017, %v1008
    %v1025 = vadd.s32 %v1020, %v1022
    %vm1026 = vc.u32 %v1020, %v1022
    %v1027 = vadd.s32 %v1023, 1
    %v1028 = vsel %vm1026, %v1027, %v1023
    %v1029 = vadd.s32 %v1024, %v1028
    %v1030 = vadd.s32 %v1029, 536870912
    %v1031 = vshrl.u32 %v1030, 30
    %v1032 = vshll.u32 %v1031, 30
    %v1033 = vsub.s32 %v1029, %v1032
    %vm1034 = vcmp.lt.s32.totalorder %v1033, 0
    %v1035 = vsub.s32 0, %v1033
    %v1036 = vsel %vm1034, %v1035, %v1033
    %v1037 = vclz %v1036
    %v1038 = vsub.s32 %v1037, 2
    %vm1039 = vcmp.gt.s32.totalorder 0, %v1038
    %v1040 = vsel %vm1039, 0, %v1038
    %v1041 = vsub.s32 32, %v1040
    %v1042 = vshll.u32 %v1033, %v1040
    %v1043 = vshrl.u32 %v1025, %v1041
    %v1044 = vor.u32 %v1042, %v1043
    %v1045 = vsub.s32 4294967266, %v1040
    %v1046 = vadd.s32 %v1045, 127
    %v1047 = vshll.u32 %v1046, 23
    %v1048 = vor.u32 4788187, %v1047
    %v1049 = vand.u32 2147483647, %v1048
    %v1051 = vcvt.s32.f32 %v1044
    %v1052 = vmul.f32 %v1051, %v1049
    %v1053 = vxor.u32 %v1052, 2147483648
    %v1054 = vsel %vm971, %v1053, %v1052
    %v1055 = vsub.s32 4, %v1031
    %v1056 = vsel %vm971, %v1055, %v1031
    %v1057 = vsel %vm970, %v864, %v1054
    %v1058 = vsel %vm970, 0, %v1056
    %v1059 = vcosq.f32.pop %v1057
    %v1060 = vsinq.f32.pop %v1057
    %vm1061 = vweird.f32 %v864
    %v1062 = vand.u32 %v1058, 3
    %vm1063 = vcmp.lt.s32.totalorder %v1062, 2
    %vm1064 = vcmp.eq.s32.totalorder %v1062, 0
    %v1065 = vxor.u32 %v1060, 2147483648
    %v1066 = vsel %vm1064, %v1059, %v1065
    %vm1067 = vcmp.eq.s32.totalorder %v1062, 2
    %v1068 = vxor.u32 %v1059, 2147483648
    %v1069 = vsel %vm1067, %v1068, %v1060
    %v1070 = vsel %vm1063, %v1066, %v1069
    %v1071 = vsel %vm1061, nan, %v1070
    %1072 = vst [vmem:[#allocation5 + $0x30] sm:$0xff] %v968
    %1073 = vst [vmem:[#allocation5 + $0x60] sm:$0xff] %v1071
    // Predicated region
    $region10: #{tpu_custom_call.1} parent=1 // pred_check
      _
    $region11: #{tpu_custom_call.1} parent=1 // pred_check_branch
      %1075 = sbr.rel (0) target = $region13
    $region12: #{tpu_custom_call.1} parent=1 // pred_region
      %s1077 = ssub.s32 1664, 1664
      %1078 = vsyncadd [#allocation4], %s1077
      %s1080 = sshll.u32 [#allocation5], 4
      %s1081 = int_to_ptr.vmem [resolvable:$true] %s1080
      %1083 = dma.vmem_to_hbm [thread:$0]  %s1081, 1664, %s1, [#allocation4]
    $region13: #{tpu_custom_call.1} parent=1 // pred_fallthru
      _
    // Predicated region
    $region14: #{tpu_custom_call.1} parent=1 // pred_check
      _
    $region15: #{tpu_custom_call.1} parent=1 // pred_check_branch
      %1085 = sbr.rel (0) target = $region17
    $region16: #{tpu_custom_call.1} parent=1 // pred_region
      %1086 = dma.done [#allocation4], 1664
    $region17: #{tpu_custom_call.1} parent=1 // pred_fallthru
      _
    %1087 = vsyncpa [#allocation3], 1
    %1088 = vsyncpa [#allocation4], 1

</llo_original>
